<compile_context>
chip_gen: v6e
topology: v6e:2x2x1
jax: 0.10.0
libtpu: 0.0.40
codegen_flags: <defaults>
</compile_context>

<pallas_src>
import functools

import jax
import jax.numpy as jnp
from jax.experimental import pallas as pl
from jax.experimental.pallas import tpu as pltpu


def aff_kernel(x_ref, r_ref, w1_ref, b1_ref, w2_ref, b2_ref,
               gw1_ref, gb1_ref, gw2_ref, gb2_ref, o_ref, *,
               matmul_dtype, approx_sigmoid, inv_hw, channels, lane_groups):
    C, P = channels, lane_groups
    BT, RI, LANE = x_ref.shape                   # (batch_tile, rows/item, 128)
    md = matmul_dtype

    x = x_ref[...]                               # lane-dense f32
    r = r_ref[...]
    xa = x + r

    # ---- local branch: per-pixel 2-layer MLP on the lane-dense layout ------
    # w1/w2 are pixel-interleaved block-diagonal, so lane p*C + c of each row
    # is channel c of the p-th pixel packed in that row; the matmul output xl
    # comes back already in the flattened output layout.
    xa2 = xa.reshape(BT * RI, LANE)
    h = jnp.dot(xa2.astype(md), w1_ref[...],
                preferred_element_type=jnp.float32) + b1_ref[...]
    h = jnp.maximum(h, 0.0)                      # (BT*RI, P*IC)
    xl = (jnp.dot(h.astype(md), w2_ref[...],
                  preferred_element_type=jnp.float32)
          + b2_ref[...]).reshape(BT, RI, LANE)   # (BT, RI, 128)

    # ---- global branch: per-item channel mean -> tiny 2-layer MLP ----------
    sums = jnp.sum(xa, axis=1)                   # (BT, 128) sublane reduce
    ch = sums[:, 0:C]
    for p in range(1, P):                        # fold the P pixel lane groups
        ch = ch + sums[:, p * C:(p + 1) * C]
    mean = ch * inv_hw                           # (BT, C)
    hg = jnp.dot(mean.astype(md), gw1_ref[...],
                 preferred_element_type=jnp.float32) + gb1_ref[...]
    hg = jnp.maximum(hg, 0.0)
    xg = jnp.dot(hg.astype(md), gw2_ref[...],
                 preferred_element_type=jnp.float32) + gb2_ref[...]  # (BT, C)
    xg = jnp.concatenate([xg] * P, axis=1)       # (BT, 128) in xl's lane layout

    # ---- sigmoid gate + fuse (all lane-dense, unmasked store) --------------
    z = xl + xg[:, None, :]                      # (BT, RI, 128)
    if approx_sigmoid:
        wei = pl.reciprocal(1.0 + jnp.exp(-z), approx=True)   # EUP exp + vrcp
    else:
        wei = jax.nn.sigmoid(z)
    # 2*x*wei + 2*r*(1-wei) == 2*(r + (x - r)*wei)  -> one fewer VPU multiply
    o_ref[...] = (2.0 * (r + (x - r) * wei)).astype(o_ref.dtype)


def aff_pallas(x, residual, params, *, batch_tile=None,
               matmul_dtype=jnp.bfloat16, approx_sigmoid=True):
    """x, residual: (B, D1, D2, C) float32, channels last (module I/O layout)."""
    B, D1, D2, C = x.shape
    HW = D1 * D2
    assert 128 % C == 0, "lane packing requires C to divide 128"
    P = 128 // C                                  # pixels packed per lane row
    assert HW % P == 0, "spatial size (D1*D2) must be a multiple of 128//C"
    RI = (HW * C) // 128                          # 128-lane rows per item

    lw1, lb1, lw2, lb2, gw1, gb1, gw2, gb2 = params
    IC = lw1.shape[1]

    # Pixel-interleaved block-diagonal weights for the local branch: the 1x1
    # convs then run directly on the lane-dense (.., 128) layout.
    w1b = jnp.zeros((128, P * IC), jnp.float32)
    w2b = jnp.zeros((P * IC, 128), jnp.float32)
    for p in range(P):
        w1b = w1b.at[p * C:(p + 1) * C, p * IC:(p + 1) * IC].set(lw1)
        w2b = w2b.at[p * IC:(p + 1) * IC, p * C:(p + 1) * C].set(lw2)
    b1b = jnp.tile(lb1, (1, P))                   # (1, P*IC)
    b2b = jnp.tile(lb2, (1, P))                   # (1, 128)

    md = matmul_dtype
    weights = [w1b.astype(md), b1b, w2b.astype(md), b2b,
               gw1.astype(md), gb1, gw2.astype(md), gb2]

    if batch_tile is None:
        # ~1 MiB of f32 per streamed array per grid step (past the measured
        # >=512-row HBM-roofline knee) while keeping >=2 steps so both v7x
        # TensorCores get work under dimension_semantics=("parallel",).
        item_bytes = HW * C * 4
        target = max(1, (1 << 20) // item_bytes)
        divs = [d for d in range(1, B + 1) if B % d == 0]
        cands = [d for d in divs if d <= target and B // d >= 2]
        batch_tile = max(cands) if cands else max(d for d in divs if d <= target)
    BT = batch_tile
    assert B % BT == 0, "batch_tile must divide the batch"
    steps = B // BT
    block_bytes = BT * RI * 128 * 4

    xf = x.reshape(B, RI, 128)                    # contiguous regroup: free
    rf = residual.reshape(B, RI, 128)

    kernel = functools.partial(
        aff_kernel, matmul_dtype=md, approx_sigmoid=approx_sigmoid,
        inv_hw=1.0 / HW, channels=C, lane_groups=P)

    def _resident(a):                             # whole array, constant index
        return pl.BlockSpec(a.shape, lambda b: (0, 0))

    io_spec = pl.BlockSpec((BT, RI, 128), lambda b: (b, 0, 0))

    cost = pl.CostEstimate(
        flops=int(4 * B * RI * 128 * (P * IC) + 12 * B * HW * C),
        transcendentals=int(B * HW * C),
        bytes_accessed=int(3 * B * HW * C * 4 + sum(4 * w.size for w in weights)),
    )

    out = pl.pallas_call(
        kernel,
        out_shape=jax.ShapeDtypeStruct((B, RI, 128), x.dtype),
        grid=(steps,),
        in_specs=[io_spec, io_spec] + [_resident(w) for w in weights],
        out_specs=io_spec,
        compiler_params=pltpu.CompilerParams(
            dimension_semantics=("parallel",),
            vmem_limit_bytes=int(min(96 * 2**20,
                                     max(24 * 2**20,
                                         8 * block_bytes + 4 * 2**20)))),
        cost_estimate=cost,
    )(xf, rf, *weights)
    return out.reshape(B, D1, D2, C)


def make_params(key, channels=32, r=4, eps=1e-5):
    """Deterministic synthetic params. Conv(1x1) bias + eval-mode BatchNorm are
    folded into a single (in, out) weight matrix and (1, out) bias per layer."""
    ic = channels // r

    def branch(key):
        ks = jax.random.split(key, 10)
        w1 = jax.random.normal(ks[0], (channels, ic), jnp.float32) * 0.1
        b1 = jax.random.normal(ks[1], (ic,), jnp.float32) * 0.1
        g1 = 1.0 + 0.1 * jax.random.normal(ks[2], (ic,), jnp.float32)
        be1 = 0.1 * jax.random.normal(ks[3], (ic,), jnp.float32)
        m1 = 0.1 * jax.random.normal(ks[4], (ic,), jnp.float32)
        v1 = jnp.abs(jax.random.normal(ks[5], (ic,), jnp.float32)) + 0.5

        w2 = jax.random.normal(ks[6], (ic, channels), jnp.float32) * 0.1
        b2 = jax.random.normal(ks[7], (channels,), jnp.float32) * 0.1
        g2 = 1.0 + 0.1 * jax.random.normal(ks[8], (channels,), jnp.float32)
        be2 = 0.1 * jax.random.normal(ks[9], (channels,), jnp.float32)
        m2 = jnp.zeros((channels,), jnp.float32)
        v2 = jnp.ones((channels,), jnp.float32)

        # fold conv bias + BN (eval): y = a*(x@W + b - m) + beta, a = g/sqrt(v+eps)
        a1 = g1 / jnp.sqrt(v1 + eps)
        w1f = w1 * a1[None, :]
        b1f = (a1 * (b1 - m1) + be1)[None, :]
        a2 = g2 / jnp.sqrt(v2 + eps)
        w2f = w2 * a2[None, :]
        b2f = (a2 * (b2 - m2) + be2)[None, :]
        return w1f, b1f, w2f, b2f

    k_local, k_global = jax.random.split(key)
    lw1, lb1, lw2, lb2 = branch(k_local)
    gw1, gb1, gw2, gb2 = branch(k_global)
    return (lw1, lb1, lw2, lb2, gw1, gb1, gw2, gb2)


def aff_reference(x, residual, params):
    """Pure-JAX reference (same folded-BN eval semantics)."""
    lw1, lb1, lw2, lb2, gw1, gb1, gw2, gb2 = params
    xa = x + residual                                           # (B,D1,D2,C)
    xl = jnp.maximum(xa @ lw1 + lb1, 0.0) @ lw2 + lb2           # per-pixel
    mean = jnp.mean(xa, axis=(1, 2), keepdims=True)             # (B,1,1,C)
    xg = jnp.maximum(mean @ gw1 + gb1, 0.0) @ gw2 + gb2
    wei = jax.nn.sigmoid(xl + xg)
    return 2.0 * x * wei + 2.0 * residual * (1.0 - wei)


if __name__ == "__main__":
    channels, r = 32, 4
    B, D1, D2 = 4, 8, 8

    key = jax.random.PRNGKey(0)
    kx, kr, kp = jax.random.split(key, 3)
    x = jax.random.normal(kx, (B, D1, D2, channels), jnp.float32)
    residual = jax.random.normal(kr, (B, D1, D2, channels), jnp.float32)
    params = make_params(kp, channels=channels, r=r)

    ref = aff_reference(x, residual, params)

    # Precise path (f32 MXU operands, exact sigmoid) -- tight check.
    out_f32 = jax.block_until_ready(
        aff_pallas(x, residual, params,
                   matmul_dtype=jnp.float32, approx_sigmoid=False))
    assert out_f32.shape == (B, D1, D2, channels)
    assert jnp.allclose(out_f32, ref, atol=1e-4, rtol=1e-4), \
        "f32 path mismatch vs reference"

    # Default fast path (bf16 MXU operands + approx-reciprocal sigmoid).
    out_fast = jax.block_until_ready(aff_pallas(x, residual, params))
    err = float(jnp.max(jnp.abs(out_fast - ref)))
    assert err < 0.1, f"fast path mismatch vs reference: {err}"

    print("KERNEL_OK")
</pallas_src>

<mosaic_0001>
module attributes {stable_mosaic.version = 11 : i64} {
  func.func @aff_kernel(%arg0: i32, %arg1: memref<2x16x128xf32, #tpu.memory_space<vmem>>, %arg2: memref<2x16x128xf32, #tpu.memory_space<vmem>>, %arg3: memref<128x32xf32, #tpu.memory_space<vmem>>, %arg4: memref<1x32xf32, #tpu.memory_space<vmem>>, %arg5: memref<32x128xf32, #tpu.memory_space<vmem>>, %arg6: memref<1x128xf32, #tpu.memory_space<vmem>>, %arg7: memref<32x8xf32, #tpu.memory_space<vmem>>, %arg8: memref<1x8xf32, #tpu.memory_space<vmem>>, %arg9: memref<8x32xf32, #tpu.memory_space<vmem>>, %arg10: memref<1x32xf32, #tpu.memory_space<vmem>>, %arg11: memref<2x16x128xf32, #tpu.memory_space<vmem>>) attributes {dimension_semantics = [#tpu.dimension_semantics<parallel>], iteration_bounds = array<i64: 2>, scalar_prefetch = 0 : i64, scratch_operands = 0 : i64, tpu.core_type = #tpu.core_type<tc>, window_params = [{transform_indices = @transform_0, window_bounds = array<i64: 2, 16, 128>}, {transform_indices = @transform_1, window_bounds = array<i64: 2, 16, 128>}, {pipeline_mode = #tpu.pipeline_mode<synchronous>, transform_indices = @transform_2, window_bounds = array<i64: 128, 32>}, {pipeline_mode = #tpu.pipeline_mode<synchronous>, transform_indices = @transform_3, window_bounds = array<i64: 1, 32>}, {pipeline_mode = #tpu.pipeline_mode<synchronous>, transform_indices = @transform_4, window_bounds = array<i64: 32, 128>}, {pipeline_mode = #tpu.pipeline_mode<synchronous>, transform_indices = @transform_5, window_bounds = array<i64: 1, 128>}, {pipeline_mode = #tpu.pipeline_mode<synchronous>, transform_indices = @transform_6, window_bounds = array<i64: 32, 8>}, {pipeline_mode = #tpu.pipeline_mode<synchronous>, transform_indices = @transform_7, window_bounds = array<i64: 1, 8>}, {pipeline_mode = #tpu.pipeline_mode<synchronous>, transform_indices = @transform_8, window_bounds = array<i64: 8, 32>}, {pipeline_mode = #tpu.pipeline_mode<synchronous>, transform_indices = @transform_9, window_bounds = array<i64: 1, 32>}, {transform_indices = @transform_10, window_bounds = array<i64: 2, 16, 128>}]} {
    %c0 = arith.constant 0 : index
    %c0_0 = arith.constant 0 : index
    %c0_1 = arith.constant 0 : index
    %0 = vector.load %arg1[%c0, %c0_0, %c0_1] : memref<2x16x128xf32, #tpu.memory_space<vmem>>, vector<2x16x128xf32>
    %c0_2 = arith.constant 0 : index
    %c0_3 = arith.constant 0 : index
    %c0_4 = arith.constant 0 : index
    %1 = vector.load %arg2[%c0_2, %c0_3, %c0_4] : memref<2x16x128xf32, #tpu.memory_space<vmem>>, vector<2x16x128xf32>
    %2 = arith.addf %0, %1 : vector<2x16x128xf32>
    %3 = vector.shape_cast %2 : vector<2x16x128xf32> to vector<32x128xf32>
    %c0_5 = arith.constant 0 : index
    %c0_6 = arith.constant 0 : index
    %4 = vector.load %arg3[%c0_5, %c0_6] : memref<128x32xf32, #tpu.memory_space<vmem>>, vector<128x32xf32>
    %cst = arith.constant dense<0.000000e+00> : vector<32x32xf32>
    %5 = tpu.matmul %3, %4, %cst {dimension_numbers = #tpu.dot_dimension_numbers<[1], [0], [0], [1], [0, 0, 1, 1], [], []>} : vector<32x128xf32>, vector<128x32xf32>, vector<32x32xf32> -> vector<32x32xf32>
    %c0_7 = arith.constant 0 : index
    %c0_8 = arith.constant 0 : index
    %6 = vector.load %arg4[%c0_7, %c0_8] : memref<1x32xf32, #tpu.memory_space<vmem>>, vector<1x32xf32>
    %7 = vector.broadcast %6 : vector<1x32xf32> to vector<32x32xf32>
    %8 = arith.addf %5, %7 : vector<32x32xf32>
    %cst_9 = arith.constant 0.000000e+00 : f32
    %9 = vector.broadcast %cst_9 : f32 to vector<32x32xf32>
    %10 = arith.maximumf %8, %9 : vector<32x32xf32>
    %c0_10 = arith.constant 0 : index
    %c0_11 = arith.constant 0 : index
    %11 = vector.load %arg5[%c0_10, %c0_11] : memref<32x128xf32, #tpu.memory_space<vmem>>, vector<32x128xf32>
    %cst_12 = arith.constant dense<0.000000e+00> : vector<32x128xf32>
    %12 = tpu.matmul %10, %11, %cst_12 {dimension_numbers = #tpu.dot_dimension_numbers<[1], [0], [0], [1], [0, 0, 1, 1], [], []>} : vector<32x32xf32>, vector<32x128xf32>, vector<32x128xf32> -> vector<32x128xf32>
    %c0_13 = arith.constant 0 : index
    %c0_14 = arith.constant 0 : index
    %13 = vector.load %arg6[%c0_13, %c0_14] : memref<1x128xf32, #tpu.memory_space<vmem>>, vector<1x128xf32>
    %14 = vector.broadcast %13 : vector<1x128xf32> to vector<32x128xf32>
    %15 = arith.addf %12, %14 : vector<32x128xf32>
    %16 = vector.shape_cast %15 : vector<32x128xf32> to vector<2x16x128xf32>
    %cst_15 = arith.constant dense<0.000000e+00> : vector<2x128xf32>
    %17 = vector.multi_reduction <add>, %2, %cst_15 [1] : vector<2x16x128xf32> to vector<2x128xf32>
    %18 = vector.extract_strided_slice %17 {offsets = [0, 0], sizes = [2, 32], strides = [1, 1]} : vector<2x128xf32> to vector<2x32xf32>
    %19 = vector.extract_strided_slice %17 {offsets = [0, 32], sizes = [2, 32], strides = [1, 1]} : vector<2x128xf32> to vector<2x32xf32>
    %20 = arith.addf %18, %19 : vector<2x32xf32>
    %21 = vector.extract_strided_slice %17 {offsets = [0, 64], sizes = [2, 32], strides = [1, 1]} : vector<2x128xf32> to vector<2x32xf32>
    %22 = arith.addf %20, %21 : vector<2x32xf32>
    %23 = vector.extract_strided_slice %17 {offsets = [0, 96], sizes = [2, 32], strides = [1, 1]} : vector<2x128xf32> to vector<2x32xf32>
    %24 = arith.addf %22, %23 : vector<2x32xf32>
    %cst_16 = arith.constant 1.562500e-02 : f32
    %25 = vector.broadcast %cst_16 : f32 to vector<2x32xf32>
    %26 = arith.mulf %24, %25 : vector<2x32xf32>
    %c0_17 = arith.constant 0 : index
    %c0_18 = arith.constant 0 : index
    %27 = vector.load %arg7[%c0_17, %c0_18] : memref<32x8xf32, #tpu.memory_space<vmem>>, vector<32x8xf32>
    %cst_19 = arith.constant dense<0.000000e+00> : vector<2x8xf32>
    %28 = tpu.matmul %26, %27, %cst_19 {dimension_numbers = #tpu.dot_dimension_numbers<[1], [0], [0], [1], [0, 0, 1, 1], [], []>} : vector<2x32xf32>, vector<32x8xf32>, vector<2x8xf32> -> vector<2x8xf32>
    %c0_20 = arith.constant 0 : index
    %c0_21 = arith.constant 0 : index
    %29 = vector.load %arg8[%c0_20, %c0_21] : memref<1x8xf32, #tpu.memory_space<vmem>>, vector<1x8xf32>
    %30 = vector.broadcast %29 : vector<1x8xf32> to vector<2x8xf32>
    %31 = arith.addf %28, %30 : vector<2x8xf32>
    %cst_22 = arith.constant 0.000000e+00 : f32
    %32 = vector.broadcast %cst_22 : f32 to vector<2x8xf32>
    %33 = arith.maximumf %31, %32 : vector<2x8xf32>
    %c0_23 = arith.constant 0 : index
    %c0_24 = arith.constant 0 : index
    %34 = vector.load %arg9[%c0_23, %c0_24] : memref<8x32xf32, #tpu.memory_space<vmem>>, vector<8x32xf32>
    %cst_25 = arith.constant dense<0.000000e+00> : vector<2x32xf32>
    %35 = tpu.matmul %33, %34, %cst_25 {dimension_numbers = #tpu.dot_dimension_numbers<[1], [0], [0], [1], [0, 0, 1, 1], [], []>} : vector<2x8xf32>, vector<8x32xf32>, vector<2x32xf32> -> vector<2x32xf32>
    %c0_26 = arith.constant 0 : index
    %c0_27 = arith.constant 0 : index
    %36 = vector.load %arg10[%c0_26, %c0_27] : memref<1x32xf32, #tpu.memory_space<vmem>>, vector<1x32xf32>
    %37 = vector.broadcast %36 : vector<1x32xf32> to vector<2x32xf32>
    %38 = arith.addf %35, %37 : vector<2x32xf32>
    %39 = tpu.concatenate %38, %38, %38, %38 in 1 : vector<2x32xf32>, vector<2x32xf32>, vector<2x32xf32>, vector<2x32xf32> -> vector<2x128xf32>
    %40 = vector.shape_cast %39 : vector<2x128xf32> to vector<2x1x128xf32>
    %41 = vector.broadcast %40 : vector<2x1x128xf32> to vector<2x16x128xf32>
    %42 = arith.addf %16, %41 : vector<2x16x128xf32>
    %43 = arith.negf %42 : vector<2x16x128xf32>
    %44 = math.exp %43 : vector<2x16x128xf32>
    %cst_28 = arith.constant 1.000000e+00 : f32
    %45 = vector.broadcast %cst_28 : f32 to vector<2x16x128xf32>
    %46 = arith.addf %45, %44 : vector<2x16x128xf32>
    %47 = arith.divf %45, %46 : vector<2x16x128xf32>
    %48 = arith.subf %0, %1 : vector<2x16x128xf32>
    %49 = arith.mulf %48, %47 : vector<2x16x128xf32>
    %50 = arith.addf %1, %49 : vector<2x16x128xf32>
    %cst_29 = arith.constant 2.000000e+00 : f32
    %51 = vector.broadcast %cst_29 : f32 to vector<2x16x128xf32>
    %52 = arith.mulf %51, %50 : vector<2x16x128xf32>
    %c0_30 = arith.constant 0 : index
    %c0_31 = arith.constant 0 : index
    %c0_32 = arith.constant 0 : index
    %53 = vector.load %arg11[%c0_30, %c0_31, %c0_32] : memref<2x16x128xf32, #tpu.memory_space<vmem>>, vector<2x16x128xf32>
    tpu.vector_store %arg11[%c0_30, %c0_31, %c0_32], %52 {strides = array<i32>} : memref<2x16x128xf32, #tpu.memory_space<vmem>>, vector<2x16x128xf32>,
    return
  }
  func.func @transform_0(%arg0: i32) -> (i32, i32, i32) {
    %c0_i32 = arith.constant 0 : i32
    %c0_i32_0 = arith.constant 0 : i32
    %c0_i32_1 = arith.constant 0 : i32
    return %arg0, %c0_i32, %c0_i32_0 : i32, i32, i32
  }
  func.func @transform_1(%arg0: i32) -> (i32, i32, i32) {
    %c0_i32 = arith.constant 0 : i32
    %c0_i32_0 = arith.constant 0 : i32
    %c0_i32_1 = arith.constant 0 : i32
    return %arg0, %c0_i32, %c0_i32_0 : i32, i32, i32
  }
  func.func @transform_2(%arg0: i32) -> (i32, i32) {
    %c0_i32 = arith.constant 0 : i32
    %c0_i32_0 = arith.constant 0 : i32
    %c0_i32_1 = arith.constant 0 : i32
    return %c0_i32, %c0_i32_0 : i32, i32
  }
  func.func @transform_3(%arg0: i32) -> (i32, i32) {
    %c0_i32 = arith.constant 0 : i32
    %c0_i32_0 = arith.constant 0 : i32
    %c0_i32_1 = arith.constant 0 : i32
    return %c0_i32, %c0_i32_0 : i32, i32
  }
  func.func @transform_4(%arg0: i32) -> (i32, i32) {
    %c0_i32 = arith.constant 0 : i32
    %c0_i32_0 = arith.constant 0 : i32
    %c0_i32_1 = arith.constant 0 : i32
    return %c0_i32, %c0_i32_0 : i32, i32
  }
  func.func @transform_5(%arg0: i32) -> (i32, i32) {
    %c0_i32 = arith.constant 0 : i32
    %c0_i32_0 = arith.constant 0 : i32
    %c0_i32_1 = arith.constant 0 : i32
    return %c0_i32, %c0_i32_0 : i32, i32
  }
  func.func @transform_6(%arg0: i32) -> (i32, i32) {
    %c0_i32 = arith.constant 0 : i32
    %c0_i32_0 = arith.constant 0 : i32
    %c0_i32_1 = arith.constant 0 : i32
    return %c0_i32, %c0_i32_0 : i32, i32
  }
  func.func @transform_7(%arg0: i32) -> (i32, i32) {
    %c0_i32 = arith.constant 0 : i32
    %c0_i32_0 = arith.constant 0 : i32
    %c0_i32_1 = arith.constant 0 : i32
    return %c0_i32, %c0_i32_0 : i32, i32
  }
  func.func @transform_8(%arg0: i32) -> (i32, i32) {
    %c0_i32 = arith.constant 0 : i32
    %c0_i32_0 = arith.constant 0 : i32
    %c0_i32_1 = arith.constant 0 : i32
    return %c0_i32, %c0_i32_0 : i32, i32
  }
  func.func @transform_9(%arg0: i32) -> (i32, i32) {
    %c0_i32 = arith.constant 0 : i32
    %c0_i32_0 = arith.constant 0 : i32
    %c0_i32_1 = arith.constant 0 : i32
    return %c0_i32, %c0_i32_0 : i32, i32
  }
  func.func @transform_10(%arg0: i32) -> (i32, i32, i32) {
    %c0_i32 = arith.constant 0 : i32
    %c0_i32_0 = arith.constant 0 : i32
    %c0_i32_1 = arith.constant 0 : i32
    return %arg0, %c0_i32, %c0_i32_0 : i32, i32, i32
  }
}

</mosaic_0001>

<llo_original>
// kernel: tpu_custom_call.1
$region0: #{tpu_custom_call.1}
  #allocation0 [shape = 'u32[]', space=smem, size = 0x4, offset = 0x4, fixed_abs, tag = 'smem constant byte address 0x4 - core index']
  #allocation1 [shape = 'u32[144,128]{1,0:T(1,128)}', space=vmem, size = 0x12000, scoped, tag = 'internal scratch']
  %s0 = inlined_call_operand.vmem [shape: f32[4,16,128], index: 0, kind: input, shape index: {}]
  %s1 = inlined_call_operand.vmem [shape: f32[4,16,128], index: 1, kind: input, shape index: {}]
  %s2 = inlined_call_operand.vmem [shape: f32[128,32], index: 2, kind: input, shape index: {}]
  %s3 = inlined_call_operand.vmem [shape: f32[1,32], index: 3, kind: input, shape index: {}]
  %s4 = inlined_call_operand.vmem [shape: f32[32,128], index: 4, kind: input, shape index: {}]
  %s5 = inlined_call_operand.vmem [shape: f32[1,128], index: 5, kind: input, shape index: {}]
  %s6 = inlined_call_operand.vmem [shape: f32[32,8], index: 6, kind: input, shape index: {}]
  %s7 = inlined_call_operand.hbm [shape: f32[1,8], index: 7, kind: input, shape index: {}]
  %s8 = inlined_call_operand.vmem [shape: f32[8,32], index: 8, kind: input, shape index: {}]
  %s9 = inlined_call_operand.vmem [shape: f32[1,32], index: 9, kind: input, shape index: {}]
  %s10 = inlined_call_operand.hbm [shape: f32[4,16,128], index: 10, kind: output, shape index: {}]
  %s11 = sld [smem:[#allocation0]]
  $region77: #{tpu_custom_call.1} parent=0
    _
  %s13 = ssub.s32 1, %s11
  %s14 = scalar_select 0, %s13, %s11
  $region1: #{tpu_custom_call.1} parent=0
    #allocation2 [shape = 'u8[512]{0}', space=vmem, size = 0x400, scoped, tag = 'input window, operand 7, single buffered']
    #allocation3 [shape = 's32[2]{0}', space=sflag, size = 0x8, scoped, tag = 'scoped memory for tpu_custom_call.1']
    #allocation4 [shape = 's32[2]{0}', space=sflag, size = 0x8, scoped, tag = 'scoped memory for tpu_custom_call.1']
    #allocation5 [shape = 'u8[32768]{0}', space=vmem, size = 0x8000, scoped, tag = 'output window, operand 0']
    %15 = vsyncpa [#allocation3], 0
    %16 = vsyncpa [#allocation4], 0
    %s17 = scalar_lea.sflag [#allocation4], 1
    %18 = vsyncpa %s17, 0
    loop: start=0, step=1, limit=4
    $region2: #{tpu_custom_call.1} parent=1 // loop_pre_header
      _
    $region3: #{tpu_custom_call.1} parent=1 // loop_header
      %s20 = sphi 0, %s24
      %p21 = scmp.ge.s32.totalorder %s20, 4
      %s30 = sphi 0, %s32
      %s33 = sphi 0, %s30
      %s34 = sphi 0, %s33
      %s50 = sphi 0, %s34
      %s56 = sphi 0, %s58
      %s59 = sphi 0, %s56
      %s60 = sphi 0, %s59
      %s76 = sphi 0, %s60
      %s80 = sphi 0, %s80
      %s82 = sphi 0, %s80
      %s83 = sphi 0, %s82
      %s97 = sphi 0, %s83
      %s101 = sphi 0, %s101
      %s103 = sphi 0, %s101
      %s104 = sphi 0, %s103
      %s118 = sphi 0, %s104
      %s122 = sphi 0, %s122
      %s124 = sphi 0, %s122
      %s125 = sphi 0, %s124
      %s139 = sphi 0, %s125
      %s143 = sphi 0, %s143
      %s145 = sphi 0, %s143
      %s146 = sphi 0, %s145
      %s160 = sphi 0, %s146
      %s164 = sphi 0, %s164
      %s166 = sphi 0, %s164
      %s167 = sphi 0, %s166
      %s181 = sphi 0, %s167
      %s185 = sphi 0, %s185
      %s187 = sphi 0, %s185
      %s188 = sphi 0, %s187
      %s202 = sphi 0, %s188
      %s206 = sphi 0, %s206
      %s208 = sphi 0, %s206
      %s209 = sphi 0, %s208
      %s223 = sphi 0, %s209
      %s227 = sphi 0, %s227
      %s229 = sphi 0, %s227
      %s230 = sphi 0, %s229
      %s244 = sphi 0, %s230
      %s250 = sphi 0, %s252
      %s253 = sphi 0, %s250
      %s254 = sphi 0, %s253
      %s270 = sphi 0, %s254
    $region4: #{tpu_custom_call.1} parent=1 // loop_header_branch
      %23 = sbr.rel (%p21) target = $region8
    $region5: #{tpu_custom_call.1} parent=1 // loop_body
      %s25 = ssub.s32 %s20, 1
      %s26 = ssub.s32 %s20, 2
      %s27 = sadd.s32 %s20, 1
      %s28 = ssub.s32 %s20, %s27
      %p29 = scmp.eq.s32.totalorder %s28, 0
      %s31 = sadd.s32 %s30, 1
      %s32 = scalar_select %p29, %s30, %s31
      %p35 = pneg %p29
      %p36 = scmp.eq.s32.totalorder %s20, 1
      %p37 = por %p35, %p36
      %p38 = scmp.ne.s32.totalorder %s30, %s33
      %p39 = scmp.eq.s32.totalorder %s20, 0
      %p40 = por %p38, %p39
      %p41 = scmp.ne.s32.totalorder %s30, %s33
      %p42 = scmp.eq.s32.totalorder %s25, 1
      %p43 = por %p41, %p42
      %p44 = scmp.ne.s32.totalorder %s33, %s34
      %p45 = scmp.eq.s32.totalorder %s25, 0
      %p46 = por %p44, %p45
      %p47 = scmp.ne.s32.totalorder %s33, %s34
      %p48 = scmp.eq.s32.totalorder %s26, 1
      %p49 = por %p47, %p48
      %p51 = scmp.ne.s32.totalorder %s34, %s50
      %p52 = scmp.eq.s32.totalorder %s26, 0
      %p53 = por %p51, %p52
      %s54 = ssub.s32 %s20, %s27
      %p55 = scmp.eq.s32.totalorder %s54, 0
      %s57 = sadd.s32 %s56, 1
      %s58 = scalar_select %p55, %s56, %s57
      %p61 = pneg %p55
      %p62 = scmp.eq.s32.totalorder %s20, 1
      %p63 = por %p61, %p62
      %p64 = scmp.ne.s32.totalorder %s56, %s59
      %p65 = scmp.eq.s32.totalorder %s20, 0
      %p66 = por %p64, %p65
      %p67 = scmp.ne.s32.totalorder %s56, %s59
      %p68 = scmp.eq.s32.totalorder %s25, 1
      %p69 = por %p67, %p68
      %p70 = scmp.ne.s32.totalorder %s59, %s60
      %p71 = scmp.eq.s32.totalorder %s25, 0
      %p72 = por %p70, %p71
      %p73 = scmp.ne.s32.totalorder %s59, %s60
      %p74 = scmp.eq.s32.totalorder %s26, 1
      %p75 = por %p73, %p74
      %p77 = scmp.ne.s32.totalorder %s60, %s76
      %p78 = scmp.eq.s32.totalorder %s26, 0
      %p79 = por %p77, %p78
      %s81 = sadd.s32 %s80, 1
      %p84 = scmp.eq.s32.totalorder %s20, 1
      %p85 = scmp.ne.s32.totalorder %s80, %s82
      %p86 = scmp.eq.s32.totalorder %s20, 0
      %p87 = por %p85, %p86
      %p88 = scmp.ne.s32.totalorder %s80, %s82
      %p89 = scmp.eq.s32.totalorder %s25, 1
      %p90 = por %p88, %p89
      %p91 = scmp.ne.s32.totalorder %s82, %s83
      %p92 = scmp.eq.s32.totalorder %s25, 0
      %p93 = por %p91, %p92
      %p94 = scmp.ne.s32.totalorder %s82, %s83
      %p95 = scmp.eq.s32.totalorder %s26, 1
      %p96 = por %p94, %p95
      %p98 = scmp.ne.s32.totalorder %s83, %s97
      %p99 = scmp.eq.s32.totalorder %s26, 0
      %p100 = por %p98, %p99
      %s102 = sadd.s32 %s101, 1
      %p105 = scmp.eq.s32.totalorder %s20, 1
      %p106 = scmp.ne.s32.totalorder %s101, %s103
      %p107 = scmp.eq.s32.totalorder %s20, 0
      %p108 = por %p106, %p107
      %p109 = scmp.ne.s32.totalorder %s101, %s103
      %p110 = scmp.eq.s32.totalorder %s25, 1
      %p111 = por %p109, %p110
      %p112 = scmp.ne.s32.totalorder %s103, %s104
      %p113 = scmp.eq.s32.totalorder %s25, 0
      %p114 = por %p112, %p113
      %p115 = scmp.ne.s32.totalorder %s103, %s104
      %p116 = scmp.eq.s32.totalorder %s26, 1
      %p117 = por %p115, %p116
      %p119 = scmp.ne.s32.totalorder %s104, %s118
      %p120 = scmp.eq.s32.totalorder %s26, 0
      %p121 = por %p119, %p120
      %s123 = sadd.s32 %s122, 1
      %p126 = scmp.eq.s32.totalorder %s20, 1
      %p127 = scmp.ne.s32.totalorder %s122, %s124
      %p128 = scmp.eq.s32.totalorder %s20, 0
      %p129 = por %p127, %p128
      %p130 = scmp.ne.s32.totalorder %s122, %s124
      %p131 = scmp.eq.s32.totalorder %s25, 1
      %p132 = por %p130, %p131
      %p133 = scmp.ne.s32.totalorder %s124, %s125
      %p134 = scmp.eq.s32.totalorder %s25, 0
      %p135 = por %p133, %p134
      %p136 = scmp.ne.s32.totalorder %s124, %s125
      %p137 = scmp.eq.s32.totalorder %s26, 1
      %p138 = por %p136, %p137
      %p140 = scmp.ne.s32.totalorder %s125, %s139
      %p141 = scmp.eq.s32.totalorder %s26, 0
      %p142 = por %p140, %p141
      %s144 = sadd.s32 %s143, 1
      %p147 = scmp.eq.s32.totalorder %s20, 1
      %p148 = scmp.ne.s32.totalorder %s143, %s145
      %p149 = scmp.eq.s32.totalorder %s20, 0
      %p150 = por %p148, %p149
      %p151 = scmp.ne.s32.totalorder %s143, %s145
      %p152 = scmp.eq.s32.totalorder %s25, 1
      %p153 = por %p151, %p152
      %p154 = scmp.ne.s32.totalorder %s145, %s146
      %p155 = scmp.eq.s32.totalorder %s25, 0
      %p156 = por %p154, %p155
      %p157 = scmp.ne.s32.totalorder %s145, %s146
      %p158 = scmp.eq.s32.totalorder %s26, 1
      %p159 = por %p157, %p158
      %p161 = scmp.ne.s32.totalorder %s146, %s160
      %p162 = scmp.eq.s32.totalorder %s26, 0
      %p163 = por %p161, %p162
      %s165 = sadd.s32 %s164, 1
      %p168 = scmp.eq.s32.totalorder %s20, 1
      %p169 = scmp.ne.s32.totalorder %s164, %s166
      %p170 = scmp.eq.s32.totalorder %s20, 0
      %p171 = por %p169, %p170
      %p172 = scmp.ne.s32.totalorder %s164, %s166
      %p173 = scmp.eq.s32.totalorder %s25, 1
      %p174 = por %p172, %p173
      %p175 = scmp.ne.s32.totalorder %s166, %s167
      %p176 = scmp.eq.s32.totalorder %s25, 0
      %p177 = por %p175, %p176
      %p178 = scmp.ne.s32.totalorder %s166, %s167
      %p179 = scmp.eq.s32.totalorder %s26, 1
      %p180 = por %p178, %p179
      %p182 = scmp.ne.s32.totalorder %s167, %s181
      %p183 = scmp.eq.s32.totalorder %s26, 0
      %p184 = por %p182, %p183
      %s186 = sadd.s32 %s185, 1
      %p189 = scmp.eq.s32.totalorder %s20, 1
      %p190 = scmp.ne.s32.totalorder %s185, %s187
      %p191 = scmp.eq.s32.totalorder %s20, 0
      %p192 = por %p190, %p191
      %p193 = scmp.ne.s32.totalorder %s185, %s187
      %p194 = scmp.eq.s32.totalorder %s25, 1
      %p195 = por %p193, %p194
      %p196 = scmp.ne.s32.totalorder %s187, %s188
      %p197 = scmp.eq.s32.totalorder %s25, 0
      %p198 = por %p196, %p197
      %p199 = scmp.ne.s32.totalorder %s187, %s188
      %p200 = scmp.eq.s32.totalorder %s26, 1
      %p201 = por %p199, %p200
      %p203 = scmp.ne.s32.totalorder %s188, %s202
      %p204 = scmp.eq.s32.totalorder %s26, 0
      %p205 = por %p203, %p204
      %s207 = sadd.s32 %s206, 1
      %p210 = scmp.eq.s32.totalorder %s20, 1
      %p211 = scmp.ne.s32.totalorder %s206, %s208
      %p212 = scmp.eq.s32.totalorder %s20, 0
      %p213 = por %p211, %p212
      %p214 = scmp.ne.s32.totalorder %s206, %s208
      %p215 = scmp.eq.s32.totalorder %s25, 1
      %p216 = por %p214, %p215
      %p217 = scmp.ne.s32.totalorder %s208, %s209
      %p218 = scmp.eq.s32.totalorder %s25, 0
      %p219 = por %p217, %p218
      %p220 = scmp.ne.s32.totalorder %s208, %s209
      %p221 = scmp.eq.s32.totalorder %s26, 1
      %p222 = por %p220, %p221
      %p224 = scmp.ne.s32.totalorder %s209, %s223
      %p225 = scmp.eq.s32.totalorder %s26, 0
      %p226 = por %p224, %p225
      %s228 = sadd.s32 %s227, 1
      %p231 = scmp.eq.s32.totalorder %s20, 1
      %p232 = scmp.ne.s32.totalorder %s227, %s229
      %p233 = scmp.eq.s32.totalorder %s20, 0
      %p234 = por %p232, %p233
      %p235 = scmp.ne.s32.totalorder %s227, %s229
      %p236 = scmp.eq.s32.totalorder %s25, 1
      %p237 = por %p235, %p236
      %p238 = scmp.ne.s32.totalorder %s229, %s230
      %p239 = scmp.eq.s32.totalorder %s25, 0
      %p240 = por %p238, %p239
      %p241 = scmp.ne.s32.totalorder %s229, %s230
      %p242 = scmp.eq.s32.totalorder %s26, 1
      %p243 = por %p241, %p242
      %p245 = scmp.ne.s32.totalorder %s230, %s244
      %p246 = scmp.eq.s32.totalorder %s26, 0
      %p247 = por %p245, %p246
      %s248 = ssub.s32 %s20, %s27
      %p249 = scmp.eq.s32.totalorder %s248, 0
      %s251 = sadd.s32 %s250, 1
      %s252 = scalar_select %p249, %s250, %s251
      %p255 = pneg %p249
      %p256 = scmp.eq.s32.totalorder %s20, 1
      %p257 = por %p255, %p256
      %p258 = scmp.ne.s32.totalorder %s250, %s253
      %p259 = scmp.eq.s32.totalorder %s20, 0
      %p260 = por %p258, %p259
      %p261 = scmp.ne.s32.totalorder %s250, %s253
      %p262 = scmp.eq.s32.totalorder %s25, 1
      %p263 = por %p261, %p262
      %p264 = scmp.ne.s32.totalorder %s253, %s254
      %p265 = scmp.eq.s32.totalorder %s25, 0
      %p266 = por %p264, %p265
      %p267 = scmp.ne.s32.totalorder %s253, %s254
      %p268 = scmp.eq.s32.totalorder %s26, 1
      %p269 = por %p267, %p268
      %p271 = scmp.ne.s32.totalorder %s254, %s270
      %p272 = scmp.eq.s32.totalorder %s26, 0
      %p273 = por %p271, %p272
      %p274 = scmp.le.s32.totalorder 1, %s20
      %p275 = scmp.lt.s32.totalorder %s20, 3
      %p276 = pnand %p274, %p275
      %p277 = pneg %p276
      // Predicated region
      $region9: #{tpu_custom_call.1} parent=5 // pred_check
        _
      $region10: #{tpu_custom_call.1} parent=5 // pred_check_branch
        %279 = sbr.rel (%p276) target = $region12
      $region11: #{tpu_custom_call.1} parent=5 // pred_region
        %s280 = ssub.s32 %s20, 1
        // Predicated region
        $region13: #{tpu_custom_call.1} parent=11 // pred_check
          %p281 = pneg %p93
        $region14: #{tpu_custom_call.1} parent=11 // pred_check_branch
          %283 = sbr.rel (%p281) target = $region16
        $region15: #{tpu_custom_call.1} parent=11 // pred_region
          _
        $region16: #{tpu_custom_call.1} parent=11 // pred_fallthru
          _
        // Predicated region
        $region17: #{tpu_custom_call.1} parent=11 // pred_check
          %p284 = pneg %p114
        $region18: #{tpu_custom_call.1} parent=11 // pred_check_branch
          %286 = sbr.rel (%p284) target = $region20
        $region19: #{tpu_custom_call.1} parent=11 // pred_region
          _
        $region20: #{tpu_custom_call.1} parent=11 // pred_fallthru
          _
        // Predicated region
        $region21: #{tpu_custom_call.1} parent=11 // pred_check
          %p287 = pneg %p135
        $region22: #{tpu_custom_call.1} parent=11 // pred_check_branch
          %289 = sbr.rel (%p287) target = $region24
        $region23: #{tpu_custom_call.1} parent=11 // pred_region
          _
        $region24: #{tpu_custom_call.1} parent=11 // pred_fallthru
          _
        // Predicated region
        $region25: #{tpu_custom_call.1} parent=11 // pred_check
          %p290 = pneg %p156
        $region26: #{tpu_custom_call.1} parent=11 // pred_check_branch
          %292 = sbr.rel (%p290) target = $region28
        $region27: #{tpu_custom_call.1} parent=11 // pred_region
          _
        $region28: #{tpu_custom_call.1} parent=11 // pred_fallthru
          _
        // Predicated region
        $region29: #{tpu_custom_call.1} parent=11 // pred_check
          %p293 = pneg %p177
        $region30: #{tpu_custom_call.1} parent=11 // pred_check_branch
          %295 = sbr.rel (%p293) target = $region32
        $region31: #{tpu_custom_call.1} parent=11 // pred_region
          _
        $region32: #{tpu_custom_call.1} parent=11 // pred_fallthru
          _
        // Predicated region
        $region33: #{tpu_custom_call.1} parent=11 // pred_check
          %p296 = pneg %p198
        $region34: #{tpu_custom_call.1} parent=11 // pred_check_branch
          %298 = sbr.rel (%p296) target = $region36
        $region35: #{tpu_custom_call.1} parent=11 // pred_region
          %s300 = ssub.s32 16, 16
          %301 = vsyncadd [#allocation3], %s300
          %s303 = sshll.u32 [#allocation2], 4
          %s304 = int_to_ptr.vmem [resolvable:$true] %s303
          %306 = dma.hbm_to_vmem [thread:$0]  %s7, 16, %s304, [#allocation3]
        $region36: #{tpu_custom_call.1} parent=11 // pred_fallthru
          _
        // Predicated region
        $region37: #{tpu_custom_call.1} parent=11 // pred_check
          %p307 = pneg %p219
        $region38: #{tpu_custom_call.1} parent=11 // pred_check_branch
          %309 = sbr.rel (%p307) target = $region40
        $region39: #{tpu_custom_call.1} parent=11 // pred_region
          _
        $region40: #{tpu_custom_call.1} parent=11 // pred_fallthru
          _
        // Predicated region
        $region41: #{tpu_custom_call.1} parent=11 // pred_check
          %p310 = pneg %p240
        $region42: #{tpu_custom_call.1} parent=11 // pred_check_branch
          %312 = sbr.rel (%p310) target = $region44
        $region43: #{tpu_custom_call.1} parent=11 // pred_region
          _
        $region44: #{tpu_custom_call.1} parent=11 // pred_fallthru
          _
      $region12: #{tpu_custom_call.1} parent=5 // pred_fallthru
        _
      %p313 = scmp.lt.s32.totalorder %s20, 2
      // Predicated region
      $region45: #{tpu_custom_call.1} parent=5 // pred_check
        %p314 = pneg %p313
      $region46: #{tpu_custom_call.1} parent=5 // pred_check_branch
        %316 = sbr.rel (%p314) target = $region48
      $region47: #{tpu_custom_call.1} parent=5 // pred_region
        // Predicated region
        $region49: #{tpu_custom_call.1} parent=47 // pred_check
          %p317 = pneg %p40
        $region50: #{tpu_custom_call.1} parent=47 // pred_check_branch
          %319 = sbr.rel (%p317) target = $region52
        $region51: #{tpu_custom_call.1} parent=47 // pred_region
          %s320 = smul.u32 2, %s20
          %p321 = scmp.lt.s32.totalorder %s320, 3
          %s322 = scalar_select %p321, %s320, 3
          %s323 = smul.addr %s322, 2
          %s324 = smul.addr %s323, 8
          %s325 = scalar_lea.vmem %s0, %s324
          %s326 = smul.u32 2, %s20
        $region52: #{tpu_custom_call.1} parent=47 // pred_fallthru
          _
        // Predicated region
        $region53: #{tpu_custom_call.1} parent=47 // pred_check
          %p327 = pneg %p66
        $region54: #{tpu_custom_call.1} parent=47 // pred_check_branch
          %329 = sbr.rel (%p327) target = $region56
        $region55: #{tpu_custom_call.1} parent=47 // pred_region
          %s330 = smul.u32 2, %s20
          %p331 = scmp.lt.s32.totalorder %s330, 3
          %s332 = scalar_select %p331, %s330, 3
          %s333 = smul.addr %s332, 2
          %s334 = smul.addr %s333, 8
          %s335 = scalar_lea.vmem %s1, %s334
          %s336 = smul.u32 2, %s20
        $region56: #{tpu_custom_call.1} parent=47 // pred_fallthru
          _
      $region48: #{tpu_custom_call.1} parent=5 // pred_fallthru
        _
      %p337 = scmp.le.s32.totalorder 1, %s20
      %p338 = scmp.lt.s32.totalorder %s20, 3
      %p339 = pnand %p337, %p338
      %p340 = pneg %p339
      // Predicated region
      $region57: #{tpu_custom_call.1} parent=5 // pred_check
        _
      $region58: #{tpu_custom_call.1} parent=5 // pred_check_branch
        %342 = sbr.rel (%p339) target = $region60
      $region59: #{tpu_custom_call.1} parent=5 // pred_region
        %s343 = ssub.s32 %s20, 1
        // Predicated region
        $region61: #{tpu_custom_call.1} parent=59 // pred_check
          %p344 = pneg %p198
        $region62: #{tpu_custom_call.1} parent=59 // pred_check_branch
          %346 = sbr.rel (%p344) target = $region64
        $region63: #{tpu_custom_call.1} parent=59 // pred_region
          %347 = dma.done [#allocation3], 16
        $region64: #{tpu_custom_call.1} parent=59 // pred_fallthru
          _
        %s348 = smul.u32 2, %s25
        %p349 = scmp.lt.s32.totalorder %s348, 3
        %s350 = scalar_select %p349, %s348, 3
        %s351 = smul.addr %s350, 2
        %s352 = smul.addr %s351, 8
        %s353 = scalar_lea.vmem %s0, %s352
        %p354 = pneg %p46
        %p355 = pneg %p43
        %s356 = smul.u32 2, %s25
        %p357 = scmp.lt.s32.totalorder %s356, 3
        %s358 = scalar_select %p357, %s356, 3
        %s359 = smul.addr %s358, 2
        %s360 = smul.addr %s359, 8
        %s361 = scalar_lea.vmem %s1, %s360
        %p362 = pneg %p72
        %p363 = pneg %p69
        %p364 = pneg %p93
        %p365 = pneg %p90
        %p366 = pneg %p114
        %p367 = pneg %p111
        %p368 = pneg %p135
        %p369 = pneg %p132
        %p370 = pneg %p156
        %p371 = pneg %p153
        %p372 = pneg %p177
        %p373 = pneg %p174
        %p374 = pneg %p198
        %p375 = pneg %p195
        %p376 = pneg %p219
        %p377 = pneg %p216
        %p378 = pneg %p240
        %p379 = pneg %p237
        %p380 = pneg %p266
        %p381 = pneg %p263
        %s382 = sand.u32 %s253, 1
        %s383 = scalar_lea.sflag [#allocation4], %s382
        %s384 = sand.u32 %s253, 1
        %s385 = smul.addr %s384, 32
        %s386 = scalar_lea.vmem [#allocation5], %s385
        %s387 = smul.u32 2, %s25
        %p388 = scmp.lt.s32.totalorder %s387, 3
        %s389 = scalar_select %p388, %s387, 3
        %s390 = smul.addr %s389, 2
        %s391 = smul.addr %s390, 8
        %s392 = scalar_lea.vmem %s0, %s391
        %s393 = smul.u32 2, %s25
        %s394 = smul.u32 2, %s25
        %p395 = scmp.lt.s32.totalorder %s394, 3
        %s396 = scalar_select %p395, %s394, 3
        %s397 = smul.addr %s396, 2
        %s398 = smul.addr %s397, 8
        %s399 = scalar_lea.vmem %s1, %s398
        %s400 = smul.u32 2, %s25
        %s401 = smul.u32 2, %s25
        %v402 = vld [vmem:[%s392] sm:$0xff]
        %v403 = vld [vmem:[%s392 + $0x8] sm:$0xff]
        %v404 = vld [vmem:[%s392 + $0x10] sm:$0xff]
        %v405 = vld [vmem:[%s392 + $0x18] sm:$0xff]
        %v406 = vld [vmem:[%s399] sm:$0xff]
        %v407 = vld [vmem:[%s399 + $0x8] sm:$0xff]
        %v408 = vld [vmem:[%s399 + $0x10] sm:$0xff]
        %v409 = vld [vmem:[%s399 + $0x18] sm:$0xff]
        %v410 = vadd.f32 %v402, %v406
        %v411 = vadd.f32 %v403, %v407
        %v412 = vadd.f32 %v404, %v408
        %v413 = vadd.f32 %v405, %v409
        %v414 = vld [vmem:[%s2] sm:$0xff]
        %v415 = vld [vmem:[%s2 + $0x8] sm:$0xff]
        %v416 = vld [vmem:[%s2 + $0x10] sm:$0xff]
        %v417 = vld [vmem:[%s2 + $0x18] sm:$0xff]
        %v418 = vld [vmem:[%s2 + $0x20] sm:$0xff]
        %v419 = vld [vmem:[%s2 + $0x28] sm:$0xff]
        %v420 = vld [vmem:[%s2 + $0x30] sm:$0xff]
        %v421 = vld [vmem:[%s2 + $0x38] sm:$0xff]
        %v422 = vld [vmem:[%s2 + $0x40] sm:$0xff]
        %v423 = vld [vmem:[%s2 + $0x48] sm:$0xff]
        %v424 = vld [vmem:[%s2 + $0x50] sm:$0xff]
        %v425 = vld [vmem:[%s2 + $0x58] sm:$0xff]
        %v426 = vld [vmem:[%s2 + $0x60] sm:$0xff]
        %v427 = vld [vmem:[%s2 + $0x68] sm:$0xff]
        %v428 = vld [vmem:[%s2 + $0x70] sm:$0xff]
        %v429 = vld [vmem:[%s2 + $0x78] sm:$0xff]
        %v430 = vld [vmem:[%s3] sm:$0x1]
        %v432 = vlaneseq
        %v433 = vshrl.u32 %v432, 7
        %v434 = vsub.s32 0, %v433
        %v435 = vrot.slane %v430, %v434
        %437 = vmatprep.subr.mxu0 0.0
        %438 = vmatpush1.msra.mxu0 %v429
        %439 = vmatprep.subr.mxu0 0.0
        %440 = vmatpush1.msra.mxu0 %v428
        %441 = vmatprep.subr.mxu0 0.0
        %442 = vmatpush1.msra.mxu0 %v427
        %443 = vmatprep.subr.mxu0 0.0
        %444 = vmatpush1.msra.mxu0 %v426
        %445 = vmatprep.subr.mxu0 0.0
        %446 = vmatpush1.msra.mxu0 %v425
        %447 = vmatprep.subr.mxu0 0.0
        %448 = vmatpush1.msra.mxu0 %v424
        %449 = vmatprep.subr.mxu0 0.0
        %450 = vmatpush1.msra.mxu0 %v423
        %451 = vmatprep.subr.mxu0 0.0
        %452 = vmatpush1.msra.mxu0 %v422
        %453 = vmatprep.subr.mxu0 0.0
        %454 = vmatpush1.msra.mxu0 %v421
        %455 = vmatprep.subr.mxu0 0.0
        %456 = vmatpush1.msra.mxu0 %v420
        %457 = vmatprep.subr.mxu0 0.0
        %458 = vmatpush1.msra.mxu0 %v419
        %459 = vmatprep.subr.mxu0 0.0
        %460 = vmatpush1.msra.mxu0 %v418
        %461 = vmatprep.subr.mxu0 0.0
        %462 = vmatpush1.msra.mxu0 %v417
        %463 = vmatprep.subr.mxu0 0.0
        %464 = vmatpush1.msra.mxu0 %v416
        %465 = vmatprep.subr.mxu0 0.0
        %466 = vmatpush1.msra.mxu0 %v415
        %467 = vmatprep.subr.mxu0 0.0
        %468 = vmatpush1.msra.mxu0 %v414
        %469 = vmatprep.subr.mxu0 0.0
        %470 = vmatpush2.msra.mxu0 0.0
        %471 = vmatprep.subr.mxu0 0.0
        %472 = vmatpush2.msra.mxu0 0.0
        %473 = vmatprep.subr.mxu0 0.0
        %474 = vmatpush2.msra.mxu0 0.0
        %475 = vmatprep.subr.mxu0 0.0
        %476 = vmatpush2.msra.mxu0 0.0
        %477 = vmatprep.subr.mxu0 0.0
        %478 = vmatpush2.msra.mxu0 0.0
        %479 = vmatprep.subr.mxu0 0.0
        %480 = vmatpush2.msra.mxu0 0.0
        %481 = vmatprep.subr.mxu0 0.0
        %482 = vmatpush2.msra.mxu0 0.0
        %483 = vmatprep.subr.mxu0 0.0
        %484 = vmatpush2.msra.mxu0 0.0
        %485 = vmatprep.subr.mxu0 0.0
        %486 = vmatpush2.msra.mxu0 0.0
        %487 = vmatprep.subr.mxu0 0.0
        %488 = vmatpush2.msra.mxu0 0.0
        %489 = vmatprep.subr.mxu0 0.0
        %490 = vmatpush2.msra.mxu0 0.0
        %491 = vmatprep.subr.mxu0 0.0
        %492 = vmatpush2.msra.mxu0 0.0
        %493 = vmatprep.subr.mxu0 0.0
        %494 = vmatpush2.msra.mxu0 0.0
        %495 = vmatprep.subr.mxu0 0.0
        %496 = vmatpush2.msra.mxu0 0.0
        %497 = vmatprep.subr.mxu0 0.0
        %498 = vmatpush2.msra.mxu0 0.0
        %499 = vmatprep.subr.mxu0 0.0
        %500 = vmatpush2.msra.mxu0 0.0
        %501 = vmatprep.mubr.f32.mxu0 0.0
        %502 = vmatmul.mubr.f32.gmra.mxu0 %v410
        %v503 = vpop.f32.mrf.mxu0
        %v504 = vadd.f32 %v435, %v503
        %v505 = vpop.f32.mrf.mxu0
        %506 = vmatprep.mubr.f32.mxu0 0.0
        %507 = vmatmul.mubr.f32.gmra.mxu0 %v411
        %v508 = vpop.f32.mrf.mxu0
        %v509 = vadd.f32 %v435, %v508
        %v510 = vpop.f32.mrf.mxu0
        %511 = vmatprep.mubr.f32.mxu0 0.0
        %512 = vmatmul.mubr.f32.gmra.mxu0 %v412
        %v513 = vpop.f32.mrf.mxu0
        %v514 = vadd.f32 %v435, %v513
        %v515 = vpop.f32.mrf.mxu0
        %516 = vmatprep.mubr.f32.mxu0 0.0
        %517 = vmatmul.mubr.f32.gmra.mxu0 %v413
        %v518 = vpop.f32.mrf.mxu0
        %v519 = vadd.f32 %v435, %v518
        %v520 = vpop.f32.mrf.mxu0
        %521 = vdwg.mxu0
        %v522 = vmax.f32 %v504, 0.0
        %v523 = vmax.f32 %v509, 0.0
        %v524 = vmax.f32 %v514, 0.0
        %v525 = vmax.f32 %v519, 0.0
        %v526 = vld [vmem:[%s4] sm:$0xff]
        %v527 = vld [vmem:[%s4 + $0x8] sm:$0xff]
        %v528 = vld [vmem:[%s4 + $0x10] sm:$0xff]
        %v529 = vld [vmem:[%s4 + $0x18] sm:$0xff]
        %v530 = vld [vmem:[%s5] sm:$0x1]
        %v532 = vlaneseq
        %v533 = vshrl.u32 %v532, 7
        %v534 = vsub.s32 0, %v533
        %v535 = vrot.slane %v530, %v534
        %vm537 = vcmask 261120
        %v539 = vsel %vm537, %v522, 0
        %v542 = vsel %vm537, %v523, 0
        %v545 = vsel %vm537, %v524, 0
        %v548 = vsel %vm537, %v525, 0
        %550 = vmatprep.subr.mxu0 0.0
        %551 = vmatpush1.msra.mxu0 0.0
        %552 = vmatprep.subr.mxu0 0.0
        %553 = vmatpush1.msra.mxu0 0.0
        %554 = vmatprep.subr.mxu0 0.0
        %555 = vmatpush1.msra.mxu0 0.0
        %556 = vmatprep.subr.mxu0 0.0
        %557 = vmatpush1.msra.mxu0 0.0
        %558 = vmatprep.subr.mxu0 0.0
        %559 = vmatpush1.msra.mxu0 0.0
        %560 = vmatprep.subr.mxu0 0.0
        %561 = vmatpush1.msra.mxu0 0.0
        %562 = vmatprep.subr.mxu0 0.0
        %563 = vmatpush1.msra.mxu0 0.0
        %564 = vmatprep.subr.mxu0 0.0
        %565 = vmatpush1.msra.mxu0 0.0
        %566 = vmatprep.subr.mxu0 0.0
        %567 = vmatpush1.msra.mxu0 0.0
        %568 = vmatprep.subr.mxu0 0.0
        %569 = vmatpush1.msra.mxu0 0.0
        %570 = vmatprep.subr.mxu0 0.0
        %571 = vmatpush1.msra.mxu0 0.0
        %572 = vmatprep.subr.mxu0 0.0
        %573 = vmatpush1.msra.mxu0 0.0
        %574 = vmatprep.subr.mxu0 0.0
        %575 = vmatpush1.msra.mxu0 %v529
        %576 = vmatprep.subr.mxu0 0.0
        %577 = vmatpush1.msra.mxu0 %v528
        %578 = vmatprep.subr.mxu0 0.0
        %579 = vmatpush1.msra.mxu0 %v527
        %580 = vmatprep.subr.mxu0 0.0
        %581 = vmatpush1.msra.mxu0 %v526
        %582 = vmatprep.subr.mxu0 0.0
        %583 = vmatpush2.msra.mxu0 0.0
        %584 = vmatprep.subr.mxu0 0.0
        %585 = vmatpush2.msra.mxu0 0.0
        %586 = vmatprep.subr.mxu0 0.0
        %587 = vmatpush2.msra.mxu0 0.0
        %588 = vmatprep.subr.mxu0 0.0
        %589 = vmatpush2.msra.mxu0 0.0
        %590 = vmatprep.subr.mxu0 0.0
        %591 = vmatpush2.msra.mxu0 0.0
        %592 = vmatprep.subr.mxu0 0.0
        %593 = vmatpush2.msra.mxu0 0.0
        %594 = vmatprep.subr.mxu0 0.0
        %595 = vmatpush2.msra.mxu0 0.0
        %596 = vmatprep.subr.mxu0 0.0
        %597 = vmatpush2.msra.mxu0 0.0
        %598 = vmatprep.subr.mxu0 0.0
        %599 = vmatpush2.msra.mxu0 0.0
        %600 = vmatprep.subr.mxu0 0.0
        %601 = vmatpush2.msra.mxu0 0.0
        %602 = vmatprep.subr.mxu0 0.0
        %603 = vmatpush2.msra.mxu0 0.0
        %604 = vmatprep.subr.mxu0 0.0
        %605 = vmatpush2.msra.mxu0 0.0
        %606 = vmatprep.subr.mxu0 0.0
        %607 = vmatpush2.msra.mxu0 0.0
        %608 = vmatprep.subr.mxu0 0.0
        %609 = vmatpush2.msra.mxu0 0.0
        %610 = vmatprep.subr.mxu0 0.0
        %611 = vmatpush2.msra.mxu0 0.0
        %612 = vmatprep.subr.mxu0 0.0
        %613 = vmatpush2.msra.mxu0 0.0
        %614 = vmatprep.mubr.f32.mxu0 0.0
        %615 = vmatmul.mubr.f32.gmra.mxu0 %v539
        %v616 = vpop.f32.mrf.mxu0
        %v617 = vadd.f32 %v535, %v616
        %v618 = vpop.f32.mrf.mxu0
        %619 = vmatprep.mubr.f32.mxu0 0.0
        %620 = vmatmul.mubr.f32.gmra.mxu0 %v542
        %v621 = vpop.f32.mrf.mxu0
        %v622 = vadd.f32 %v535, %v621
        %v623 = vpop.f32.mrf.mxu0
        %624 = vmatprep.mubr.f32.mxu0 0.0
        %625 = vmatmul.mubr.f32.gmra.mxu0 %v545
        %v626 = vpop.f32.mrf.mxu0
        %v627 = vadd.f32 %v535, %v626
        %v628 = vpop.f32.mrf.mxu0
        %629 = vmatprep.mubr.f32.mxu0 0.0
        %630 = vmatmul.mubr.f32.gmra.mxu0 %v548
        %v631 = vpop.f32.mrf.mxu0
        %v632 = vadd.f32 %v535, %v631
        %v633 = vpop.f32.mrf.mxu0
        %634 = vdwg.mxu0
        %v635 = vadd.f32 %v410, %v411
        %v636 = vrot.slane %v635, 4
        %v637 = vadd.f32 %v635, %v636
        %v638 = vrot.slane %v637, 2
        %v639 = vadd.f32 %v637, %v638
        %v640 = vrot.slane %v639, 1
        %v641 = vadd.f32 %v639, %v640
        %v642 = vadd.f32 %v412, %v413
        %v643 = vrot.slane %v642, 4
        %v644 = vadd.f32 %v642, %v643
        %v645 = vrot.slane %v644, 2
        %v646 = vadd.f32 %v644, %v645
        %v647 = vrot.slane %v646, 1
        %v648 = vadd.f32 %v646, %v647
        %651 = vrot.lane.b32.xlu0 %v641, 96
        %v652 = vpop.permute.xlu0 %651
        %653 = vrot.lane.b32.xlu0 %v648, 96
        %v654 = vpop.permute.xlu0 %653
        %v657 = vadd.f32 %v641, %v652
        %v658 = vadd.f32 %v648, %v654
        %659 = vrot.lane.b32.xlu0 %v641, 64
        %v660 = vpop.permute.xlu0 %659
        %661 = vrot.lane.b32.xlu0 %v648, 64
        %v662 = vpop.permute.xlu0 %661
        %v665 = vadd.f32 %v657, %v660
        %v666 = vadd.f32 %v658, %v662
        %667 = vrot.lane.b32.xlu0 %v641, 32
        %v668 = vpop.permute.xlu0 %667
        %669 = vrot.lane.b32.xlu0 %v648, 32
        %v670 = vpop.permute.xlu0 %669
        %v673 = vadd.f32 %v665, %v668
        %v674 = vadd.f32 %v666, %v670
        %v675 = vmul.f32 %v673, 0.015625
        %v676 = vmul.f32 %v674, 0.015625
        %v677 = vld [vmem:[%s6] sm:$0xff]
        %v678 = vld [vmem:[%s6 + $0x8] sm:$0xff]
        %v679 = vld [vmem:[%s6 + $0x10] sm:$0xff]
        %v680 = vld [vmem:[%s6 + $0x18] sm:$0xff]
        %v681 = vld [vmem:[#allocation2] sm:$0x1]
        %v683 = vlaneseq
        %v684 = vshrl.u32 %v683, 7
        %v685 = vsub.s32 0, %v684
        %v686 = vrot.slane %v681, %v685
        %v690 = vrot.slane %v676, 7
        %vm691 = vcmask 1041409
        %v692 = vsel %vm691, %v690, %v675
        %v693 = vsel %vm537, %v692, 0
        %695 = vmatprep.subr.mxu0 0.0
        %696 = vmatpush1.msra.mxu0 0.0
        %697 = vmatprep.subr.mxu0 0.0
        %698 = vmatpush1.msra.mxu0 0.0
        %699 = vmatprep.subr.mxu0 0.0
        %700 = vmatpush1.msra.mxu0 0.0
        %701 = vmatprep.subr.mxu0 0.0
        %702 = vmatpush1.msra.mxu0 0.0
        %703 = vmatprep.subr.mxu0 0.0
        %704 = vmatpush1.msra.mxu0 0.0
        %705 = vmatprep.subr.mxu0 0.0
        %706 = vmatpush1.msra.mxu0 0.0
        %707 = vmatprep.subr.mxu0 0.0
        %708 = vmatpush1.msra.mxu0 0.0
        %709 = vmatprep.subr.mxu0 0.0
        %710 = vmatpush1.msra.mxu0 0.0
        %711 = vmatprep.subr.mxu0 0.0
        %712 = vmatpush1.msra.mxu0 0.0
        %713 = vmatprep.subr.mxu0 0.0
        %714 = vmatpush1.msra.mxu0 0.0
        %715 = vmatprep.subr.mxu0 0.0
        %716 = vmatpush1.msra.mxu0 0.0
        %717 = vmatprep.subr.mxu0 0.0
        %718 = vmatpush1.msra.mxu0 0.0
        %719 = vmatprep.subr.mxu0 0.0
        %720 = vmatpush1.msra.mxu0 %v680
        %721 = vmatprep.subr.mxu0 0.0
        %722 = vmatpush1.msra.mxu0 %v679
        %723 = vmatprep.subr.mxu0 0.0
        %724 = vmatpush1.msra.mxu0 %v678
        %725 = vmatprep.subr.mxu0 0.0
        %726 = vmatpush1.msra.mxu0 %v677
        %727 = vmatprep.subr.mxu0 0.0
        %728 = vmatpush2.msra.mxu0 0.0
        %729 = vmatprep.subr.mxu0 0.0
        %730 = vmatpush2.msra.mxu0 0.0
        %731 = vmatprep.subr.mxu0 0.0
        %732 = vmatpush2.msra.mxu0 0.0
        %733 = vmatprep.subr.mxu0 0.0
        %734 = vmatpush2.msra.mxu0 0.0
        %735 = vmatprep.subr.mxu0 0.0
        %736 = vmatpush2.msra.mxu0 0.0
        %737 = vmatprep.subr.mxu0 0.0
        %738 = vmatpush2.msra.mxu0 0.0
        %739 = vmatprep.subr.mxu0 0.0
        %740 = vmatpush2.msra.mxu0 0.0
        %741 = vmatprep.subr.mxu0 0.0
        %742 = vmatpush2.msra.mxu0 0.0
        %743 = vmatprep.subr.mxu0 0.0
        %744 = vmatpush2.msra.mxu0 0.0
        %745 = vmatprep.subr.mxu0 0.0
        %746 = vmatpush2.msra.mxu0 0.0
        %747 = vmatprep.subr.mxu0 0.0
        %748 = vmatpush2.msra.mxu0 0.0
        %749 = vmatprep.subr.mxu0 0.0
        %750 = vmatpush2.msra.mxu0 0.0
        %751 = vmatprep.subr.mxu0 0.0
        %752 = vmatpush2.msra.mxu0 0.0
        %753 = vmatprep.subr.mxu0 0.0
        %754 = vmatpush2.msra.mxu0 0.0
        %755 = vmatprep.subr.mxu0 0.0
        %756 = vmatpush2.msra.mxu0 0.0
        %757 = vmatprep.subr.mxu0 0.0
        %758 = vmatpush2.msra.mxu0 0.0
        %759 = vmatprep.mubr.f32.mxu0 0.0
        %760 = vmatmul.mubr.f32.gmra.mxu0 %v693
        %v761 = vpop.f32.mrf.mxu0
        %v762 = vadd.f32 %v686, %v761
        %v763 = vpop.f32.mrf.mxu0
        %764 = vdwg.mxu0
        %v765 = vmax.f32 %v762, 0.0
        %v766 = vld [vmem:[%s8] sm:$0xff]
        %v767 = vld [vmem:[%s9] sm:$0x1]
        %v769 = vlaneseq
        %v770 = vshrl.u32 %v769, 7
        %v771 = vsub.s32 0, %v770
        %v772 = vrot.slane %v767, %v771
        %vm774 = vcmask 64512
        %v776 = vsel %vm774, %v765, 0
        %778 = vmatprep.subr.mxu0 0.0
        %779 = vmatpush1.msra.mxu0 0.0
        %780 = vmatprep.subr.mxu0 0.0
        %781 = vmatpush1.msra.mxu0 0.0
        %782 = vmatprep.subr.mxu0 0.0
        %783 = vmatpush1.msra.mxu0 0.0
        %784 = vmatprep.subr.mxu0 0.0
        %785 = vmatpush1.msra.mxu0 0.0
        %786 = vmatprep.subr.mxu0 0.0
        %787 = vmatpush1.msra.mxu0 0.0
        %788 = vmatprep.subr.mxu0 0.0
        %789 = vmatpush1.msra.mxu0 0.0
        %790 = vmatprep.subr.mxu0 0.0
        %791 = vmatpush1.msra.mxu0 0.0
        %792 = vmatprep.subr.mxu0 0.0
        %793 = vmatpush1.msra.mxu0 0.0
        %794 = vmatprep.subr.mxu0 0.0
        %795 = vmatpush1.msra.mxu0 0.0
        %796 = vmatprep.subr.mxu0 0.0
        %797 = vmatpush1.msra.mxu0 0.0
        %798 = vmatprep.subr.mxu0 0.0
        %799 = vmatpush1.msra.mxu0 0.0
        %800 = vmatprep.subr.mxu0 0.0
        %801 = vmatpush1.msra.mxu0 0.0
        %802 = vmatprep.subr.mxu0 0.0
        %803 = vmatpush1.msra.mxu0 0.0
        %804 = vmatprep.subr.mxu0 0.0
        %805 = vmatpush1.msra.mxu0 0.0
        %806 = vmatprep.subr.mxu0 0.0
        %807 = vmatpush1.msra.mxu0 0.0
        %808 = vmatprep.subr.mxu0 0.0
        %809 = vmatpush1.msra.mxu0 %v766
        %810 = vmatprep.subr.mxu0 0.0
        %811 = vmatpush2.msra.mxu0 0.0
        %812 = vmatprep.subr.mxu0 0.0
        %813 = vmatpush2.msra.mxu0 0.0
        %814 = vmatprep.subr.mxu0 0.0
        %815 = vmatpush2.msra.mxu0 0.0
        %816 = vmatprep.subr.mxu0 0.0
        %817 = vmatpush2.msra.mxu0 0.0
        %818 = vmatprep.subr.mxu0 0.0
        %819 = vmatpush2.msra.mxu0 0.0
        %820 = vmatprep.subr.mxu0 0.0
        %821 = vmatpush2.msra.mxu0 0.0
        %822 = vmatprep.subr.mxu0 0.0
        %823 = vmatpush2.msra.mxu0 0.0
        %824 = vmatprep.subr.mxu0 0.0
        %825 = vmatpush2.msra.mxu0 0.0
        %826 = vmatprep.subr.mxu0 0.0
        %827 = vmatpush2.msra.mxu0 0.0
        %828 = vmatprep.subr.mxu0 0.0
        %829 = vmatpush2.msra.mxu0 0.0
        %830 = vmatprep.subr.mxu0 0.0
        %831 = vmatpush2.msra.mxu0 0.0
        %832 = vmatprep.subr.mxu0 0.0
        %833 = vmatpush2.msra.mxu0 0.0
        %834 = vmatprep.subr.mxu0 0.0
        %835 = vmatpush2.msra.mxu0 0.0
        %836 = vmatprep.subr.mxu0 0.0
        %837 = vmatpush2.msra.mxu0 0.0
        %838 = vmatprep.subr.mxu0 0.0
        %839 = vmatpush2.msra.mxu0 0.0
        %840 = vmatprep.subr.mxu0 0.0
        %841 = vmatpush2.msra.mxu0 0.0
        %842 = vmatprep.mubr.f32.mxu0 0.0
        %843 = vmatmul.mubr.f32.gmra.mxu0 %v776
        %v844 = vpop.f32.mrf.mxu0
        %v845 = vadd.f32 %v772, %v844
        %v846 = vpop.f32.mrf.mxu0
        %847 = vdwg.mxu0
        %849 = vrot.lane.b32.xlu0 %v845, 32
        %v850 = vpop.permute.xlu0 %849
        %852 = vrot.lane.b32.xlu0 %v845, 64
        %v853 = vpop.permute.xlu0 %852
        %855 = vrot.lane.b32.xlu0 %v845, 96
        %v856 = vpop.permute.xlu0 %855
        %v858 = vsel %vm537, %v845, %v850
        %vm859 = vcmask 523264
        %v860 = vsel %vm859, %v858, %v853
        %vm861 = vcmask 785408
        %v862 = vsel %vm861, %v860, %v856
        %v865 = vunpack.c.l.s4 1966171168
        %v866 = vunpack.c.0.s8 %v865
        %v867 = vlaneseq
        %v868 = vshrl.u32 %v867, 7
        %v869 = vsub.s32 %v866, %v868
        %v870 = vrot.slane %v862, %v869
        %v871 = vcombine.high %v870, %v870
        %v873 = vunpack.c.l.s4 1966171168
        %v874 = vunpack.c.0.s8 %v873
        %v875 = vlaneseq
        %v876 = vshrl.u32 %v875, 7
        %v877 = vsub.s32 %v874, %v876
        %v878 = vrot.slane %v870, %v877
        %v880 = vunpack.c.l.s4 1966171168
        %v881 = vunpack.c.0.s8 %v880
        %v882 = vlaneseq
        %v883 = vshrl.u32 %v882, 7
        %v884 = vsub.s32 %v881, %v883
        %v885 = vrot.slane %v871, %v884
        %v886 = vlaneseq
        %v887 = vshrl.u32 %v886, 7
        %v888 = vsub.s32 0, %v887
        %v889 = vrot.slane %v878, %v888
        %v890 = vlaneseq
        %v891 = vshrl.u32 %v890, 7
        %v892 = vsub.s32 0, %v891
        %v893 = vrot.slane %v885, %v892
        %v896 = vadd.f32 %v617, %v889
        %v897 = vadd.f32 %v622, %v889
        %v898 = vadd.f32 %v627, %v893
        %v899 = vadd.f32 %v632, %v893
        %v900 = vxor.u32 %v896, 2147483648
        %v901 = vxor.u32 %v897, 2147483648
        %v902 = vxor.u32 %v898, 2147483648
        %v903 = vxor.u32 %v899, 2147483648
        %v904 = vmul.f32 %v900, 1.442695
        %v905 = vpow.pop %v904
        %v906 = vmul.f32 %v901, 1.442695
        %v907 = vpow.pop %v906
        %v908 = vmul.f32 %v902, 1.442695
        %v909 = vpow.pop %v908
        %v910 = vmul.f32 %v903, 1.442695
        %v911 = vpow.pop %v910
        %v912 = vadd.f32 %v905, 1.0
        %v913 = vadd.f32 %v907, 1.0
        %v914 = vadd.f32 %v909, 1.0
        %v915 = vadd.f32 %v911, 1.0
        %v916 = vrcp.pop %v912
        %v917 = vmul.f32 1.0, %v916
        %v918 = vrcp.pop %v913
        %v919 = vmul.f32 1.0, %v918
        %v920 = vrcp.pop %v914
        %v921 = vmul.f32 1.0, %v920
        %v922 = vrcp.pop %v915
        %v923 = vmul.f32 1.0, %v922
        %v924 = vsub.f32 %v402, %v406
        %v925 = vsub.f32 %v403, %v407
        %v926 = vsub.f32 %v404, %v408
        %v927 = vsub.f32 %v405, %v409
        %v928 = vmul.f32 %v924, %v917
        %v929 = vmul.f32 %v925, %v919
        %v930 = vmul.f32 %v926, %v921
        %v931 = vmul.f32 %v927, %v923
        %v932 = vadd.f32 %v406, %v928
        %v933 = vadd.f32 %v407, %v929
        %v934 = vadd.f32 %v408, %v930
        %v935 = vadd.f32 %v409, %v931
        %v936 = vmul.f32 %v932, 2.0
        %v937 = vmul.f32 %v933, 2.0
        %v938 = vmul.f32 %v934, 2.0
        %v939 = vmul.f32 %v935, 2.0
        %940 = vst [vmem:[%s386] sm:$0xff] %v936
        %941 = vst [vmem:[%s386 + $0x8] sm:$0xff] %v937
        %942 = vst [vmem:[%s386 + $0x10] sm:$0xff] %v938
        %943 = vst [vmem:[%s386 + $0x18] sm:$0xff] %v939
        %s944 = sand.u32 %s253, 1
        %s945 = scalar_lea.sflag [#allocation4], %s944
        %s946 = sand.u32 %s253, 1
        %s947 = smul.addr %s946, 32
        %s948 = scalar_lea.vmem [#allocation5], %s947
        // Predicated region
        $region65: #{tpu_custom_call.1} parent=59 // pred_check
          %p949 = pneg %p263
        $region66: #{tpu_custom_call.1} parent=59 // pred_check_branch
          %951 = sbr.rel (%p949) target = $region68
        $region67: #{tpu_custom_call.1} parent=59 // pred_region
          %s952 = smul.u32 2, %s25
          %s954 = ssub.s32 512, 512
          %955 = vsyncadd %s945, %s954
          %s956 = smul.addr %s952, 2
          %s957 = smul.addr %s956, 128
          %s958 = scalar_lea.hbm %s10, %s957
          %s959 = sshll.u32 %s948, 4
          %s960 = int_to_ptr.vmem [resolvable:$true] %s959
          %965 = dma.vmem_to_hbm [thread:$0]  %s960, 512, %s958, %s945, 128, 128, 8
        $region68: #{tpu_custom_call.1} parent=59 // pred_fallthru
          _
      $region60: #{tpu_custom_call.1} parent=5 // pred_fallthru
        _
      %p966 = scmp.le.s32.totalorder 2, %s20
      // Predicated region
      $region69: #{tpu_custom_call.1} parent=5 // pred_check
        %p967 = pneg %p966
      $region70: #{tpu_custom_call.1} parent=5 // pred_check_branch
        %969 = sbr.rel (%p967) target = $region72
      $region71: #{tpu_custom_call.1} parent=5 // pred_region
        %s970 = ssub.s32 %s20, 2
        // Predicated region
        $region73: #{tpu_custom_call.1} parent=71 // pred_check
          %p971 = pneg %p269
        $region74: #{tpu_custom_call.1} parent=71 // pred_check_branch
          %973 = sbr.rel (%p971) target = $region76
        $region75: #{tpu_custom_call.1} parent=71 // pred_region
          %s974 = sand.u32 %s254, 1
          %s975 = scalar_lea.sflag [#allocation4], %s974
          %s976 = sand.u32 %s254, 1
          %s977 = smul.addr %s976, 32
          %s978 = scalar_lea.vmem [#allocation5], %s977
          %979 = dma.done %s975, 512
        $region76: #{tpu_custom_call.1} parent=71 // pred_fallthru
          _
      $region72: #{tpu_custom_call.1} parent=5 // pred_fallthru
        _
    $region6: #{tpu_custom_call.1} parent=1 // loop_footer
      %s24 = sadd.s32 1, %s20
    $region7: #{tpu_custom_call.1} parent=1 // loop_footer_branch
      %19 = sbr.rel target = $region3
    $region8: #{tpu_custom_call.1} parent=1 // loop_exit
      _
    %980 = vsyncpa [#allocation3], 1
    %s981 = scalar_lea.sflag [#allocation3], 1
    %982 = vsyncpa %s981, 1
    %983 = vsyncpa [#allocation4], 1
    %s984 = scalar_lea.sflag [#allocation4], 1
    %985 = vsyncpa %s984, 1

</llo_original>
